<compile_context>
chip_gen: v6e
topology: v6e:2x2x1
jax: 0.10.0
libtpu: 0.0.40
codegen_flags: <defaults>
</compile_context>

<pallas_src>
import numpy as np
import jax
import jax.numpy as jnp
from jax import lax
from jax.experimental import pallas as pl
from jax.experimental.pallas import tpu as pltpu

# ----------------------------------------------------------------------------
# Hyperparameters (covert_parameters['n_channel'], covert_parameters['m'])
# ----------------------------------------------------------------------------
N_CHANNEL = 8      # must be even so the conv chain ends with length N-4
M_OUT = 4          # covert_parameters['m']
BATCH = 2

LRELU_SLOPE = 0.2
WIDTH = 128        # padded lane width used for every layer inside the kernel
NUM_LAYERS = 8     # Linear, Conv1..Conv5 (as dense), Linear, Linear
_ACTS = ("tanh", "lrelu", "lrelu", "lrelu", "lrelu", "lrelu", "tanh", "none")

ROW_ALIGN = 16     # satisfies both f32 (8,128) and bf16 (16,128) native tiling
SUB_ROWS = 256     # rows per in-register pass inside the kernel
TB_CAP = 512       # max rows per grid step


def _round_up(v, m):
    return ((v + m - 1) // m) * m


# ----------------------------------------------------------------------------
# Pallas kernel: whole forward pass on one (TB, 128) batch tile.
# ----------------------------------------------------------------------------
def _layer_chain(t16, w_ref, b_all):
    """Run the 8-layer chain on a bf16 (rows, 128) activation tile. Returns f32."""
    t = None
    for i, act in enumerate(_ACTS):     # static unroll, 8 layers
        # bf16 MXU matmul, f32 accumulate. Weight slab i is (128, 128) bf16.
        y = jnp.dot(t16, w_ref[i], preferred_element_type=jnp.float32)
        y = y + b_all[i:i + 1, :]       # broadcast bias add (f32, VPU)
        if act == "tanh":
            t = jnp.tanh(y)
        elif act == "lrelu":
            t = jnp.maximum(y, LRELU_SLOPE * y)   # 2 VPU ops vs 3 for where()
        else:
            t = y
        if i + 1 < NUM_LAYERS:
            t16 = t.astype(jnp.bfloat16)
    return t                            # (rows, 128) f32


def bob_kernel(x_ref, w_ref, b_ref, out_ref):
    b_all = b_ref[...]                  # (8, 128) f32, loaded once per grid step
    tb = x_ref.shape[0]

    if tb <= SUB_ROWS:
        # Single in-register pass over the whole tile.
        t = _layer_chain(x_ref[...], w_ref, b_all)
        out_ref[...] = t[:, :M_OUT]     # compact (TB, M_OUT) store
    else:
        # TB is a multiple of SUB_ROWS by construction; keep each sub-tile's
        # f32 activation chain vreg-resident (fori_loop bounds live ranges).
        nsub = tb // SUB_ROWS

        def body(s, carry):
            r = pl.multiple_of(s * SUB_ROWS, SUB_ROWS)
            t = _layer_chain(x_ref[pl.ds(r, SUB_ROWS), :], w_ref, b_all)
            out_ref[pl.ds(r, SUB_ROWS), :] = t[:, :M_OUT]
            return carry

        lax.fori_loop(0, nsub, body, 0)


# ----------------------------------------------------------------------------
# Host-side glue: Conv1d(Cin, Cout, K, stride) -> dense matrix so that
# (B, Cin*Lin) @ W -> (B, Cout*Lout), matching PyTorch NCW channel-major flatten.
# Runs once at parameter-pack time (numpy).
# ----------------------------------------------------------------------------
def conv1d_as_dense_np(w, b, lin_len, stride):
    cout, cin, k = w.shape
    lout = (lin_len - k) // stride + 1
    W = np.zeros((cin * lin_len, cout * lout), dtype=np.float32)
    for co in range(cout):
        for l in range(lout):
            for kk in range(k):
                for ci in range(cin):
                    W[ci * lin_len + l * stride + kk, co * lout + l] = w[co, ci, kk]
    b_flat = np.repeat(np.asarray(b, np.float32), lout)
    return W, b_flat, lout


def init_params(key):
    """Deterministic parameter init (same shapes as the PyTorch module).
    Linear weights are stored transposed, i.e. (in_features, out_features)."""
    N, M = N_CHANNEL, M_OUT
    ks = jax.random.split(key, 16)

    def rnd(k, shape, scale=0.1):
        return np.asarray(scale * jax.random.normal(k, shape), dtype=np.float32)

    p = {}
    p["w0"] = rnd(ks[0], (2 * N, 2 * N));           p["b0"] = rnd(ks[1], (2 * N,))
    p["cw1"] = rnd(ks[2], (N, 1, 1));               p["cb1"] = rnd(ks[3], (N,))
    p["cw2"] = rnd(ks[4], (N, N, 2));               p["cb2"] = rnd(ks[5], (N,))
    p["cw3"] = rnd(ks[6], (N, N, 4));               p["cb3"] = rnd(ks[7], (N,))
    p["cw4"] = rnd(ks[8], (N, N, 2));               p["cb4"] = rnd(ks[9], (N,))
    p["cw5"] = rnd(ks[10], (N, N, 2));              p["cb5"] = rnd(ks[11], (N,))
    p["wf1"] = rnd(ks[12], (N * (N - 4), 2 * N));   p["bf1"] = rnd(ks[13], (2 * N,))
    p["wf2"] = rnd(ks[14], (2 * N, M));             p["bf2"] = rnd(ks[15], (M,))
    return p


def pack_params(p):
    """Lower convs to dense matrices and pack all layers into two padded blobs."""
    N = N_CHANNEL
    L = 2 * N
    dense = [(p["w0"], p["b0"])]
    Wc1, bc1, L = conv1d_as_dense_np(p["cw1"], p["cb1"], L, 1); dense.append((Wc1, bc1))
    Wc2, bc2, L = conv1d_as_dense_np(p["cw2"], p["cb2"], L, 1); dense.append((Wc2, bc2))
    Wc3, bc3, L = conv1d_as_dense_np(p["cw3"], p["cb3"], L, 2); dense.append((Wc3, bc3))
    Wc4, bc4, L = conv1d_as_dense_np(p["cw4"], p["cb4"], L, 1); dense.append((Wc4, bc4))
    Wc5, bc5, L = conv1d_as_dense_np(p["cw5"], p["cb5"], L, 1); dense.append((Wc5, bc5))
    assert L == N - 4
    dense.append((p["wf1"], p["bf1"]))
    dense.append((p["wf2"], p["bf2"]))
    assert len(dense) == NUM_LAYERS

    w_blob = np.zeros((NUM_LAYERS, WIDTH, WIDTH), dtype=np.float32)
    b_blob = np.zeros((NUM_LAYERS, WIDTH), dtype=np.float32)
    for i, (W, b) in enumerate(dense):
        kin, nout = W.shape
        # TODO(synk): if N_CHANNEL ever grows so a layer exceeds 128 in K or N,
        # switch from the zero-padded dense lowering to an im2col / strided-slice form.
        assert kin <= WIDTH and nout <= WIDTH
        w_blob[i, :kin, :nout] = W
        b_blob[i, :nout] = b
    return (jnp.asarray(w_blob, dtype=jnp.bfloat16),
            jnp.asarray(b_blob, dtype=jnp.float32),
            dense)


# ----------------------------------------------------------------------------
# Wrapper: pad batch rows (align 16), bf16 input, batch-tiled grid,
# VMEM-resident weights, compact (Bp, M_OUT) output.
# ----------------------------------------------------------------------------
def _choose_tb(B):
    Bp = _round_up(max(B, 1), ROW_ALIGN)
    if Bp <= 2 * ROW_ALIGN:
        return Bp                               # tiny batch: fixed-cost regime, one tile
    # Aim for >= 2 grid steps so the "parallel" axis can shard across v7x's 2 TCs.
    tb = _round_up(-(-Bp // 2), ROW_ALIGN)
    tb = min(tb, TB_CAP)
    if tb > SUB_ROWS:                           # keep TB a multiple of the sub-tile size
        tb = (tb // SUB_ROWS) * SUB_ROWS
    return tb


@jax.jit
def bob_forward(x, w_blob, b_blob):
    B, F = x.shape
    TB = _choose_tb(B)
    Bp = _round_up(B, TB)

    # bf16 input, zero-padded to (Bp, 128) lanes (zeros propagate exactly).
    xp = jnp.zeros((Bp, WIDTH), jnp.bfloat16).at[:B, :F].set(x.astype(jnp.bfloat16))

    out = pl.pallas_call(
        bob_kernel,
        out_shape=jax.ShapeDtypeStruct((Bp, M_OUT), jnp.float32),
        grid_spec=pltpu.PrefetchScalarGridSpec(
            num_scalar_prefetch=0,
            grid=(Bp // TB,),
            in_specs=[
                pl.BlockSpec((TB, WIDTH), lambda i: (i, 0)),                    # x tile (bf16)
                pl.BlockSpec((NUM_LAYERS, WIDTH, WIDTH), lambda i: (0, 0, 0)),  # weights, resident
                pl.BlockSpec((NUM_LAYERS, WIDTH), lambda i: (0, 0)),            # biases, resident
            ],
            # Compact output: last block dim equals the full array dim (M_OUT), legal.
            out_specs=pl.BlockSpec((TB, M_OUT), lambda i: (i, 0)),
        ),
        compiler_params=pltpu.CompilerParams(
            dimension_semantics=("parallel",)),   # shards batch tiles across v7x's 2 TCs
    )(xp, w_blob, b_blob)
    return out[:B]


# ----------------------------------------------------------------------------
# References for verification.
# ----------------------------------------------------------------------------
def bob_reference_f32(x, p):
    """Mirrors the PyTorch module exactly, in f32."""
    def lrelu(v):
        return jnp.where(v >= 0.0, v, LRELU_SLOPE * v)

    t = jnp.tanh(x @ p["w0"] + p["b0"])
    t = t[:, None, :]                                             # (B, 1, 2N) NCW

    def conv1d(xin, w, b, stride):
        cout, cin, k = w.shape
        lin_len = xin.shape[-1]
        lout = (lin_len - k) // stride + 1
        cols = []
        for l in range(lout):
            patch = xin[:, :, l * stride: l * stride + k]         # (B, Cin, K)
            cols.append(jnp.einsum("bik,oik->bo", patch, w) + b)  # (B, Cout)
        return jnp.stack(cols, axis=-1)                           # (B, Cout, Lout)

    t = lrelu(conv1d(t, p["cw1"], p["cb1"], 1))
    t = lrelu(conv1d(t, p["cw2"], p["cb2"], 1))
    t = lrelu(conv1d(t, p["cw3"], p["cb3"], 2))
    t = lrelu(conv1d(t, p["cw4"], p["cb4"], 1))
    t = lrelu(conv1d(t, p["cw5"], p["cb5"], 1))
    t = t.reshape(t.shape[0], -1)                                 # channel-major flatten
    t = jnp.tanh(t @ p["wf1"] + p["bf1"])
    return t @ p["wf2"] + p["bf2"]


def bob_reference_bf16(x, dense):
    """Same dense lowering, mimicking the kernel's bf16-matmul / f32-accumulate path."""
    t16 = jnp.asarray(x, jnp.bfloat16)
    t = None
    for (W, b), act in zip(dense, _ACTS):
        y = jnp.dot(t16, jnp.asarray(W, jnp.bfloat16),
                    preferred_element_type=jnp.float32) + jnp.asarray(b, jnp.float32)
        if act == "tanh":
            t = jnp.tanh(y)
        elif act == "lrelu":
            t = jnp.maximum(y, LRELU_SLOPE * y)
        else:
            t = y
        t16 = t.astype(jnp.bfloat16)
    return t


if __name__ == "__main__":
    key = jax.random.PRNGKey(0)
    kx, kp, kx2 = jax.random.split(key, 3)

    params = init_params(kp)
    w_blob, b_blob, dense = pack_params(params)

    # --- Nominal shape (B=2), matching the module's usage -------------------
    x = jax.random.normal(kx, (BATCH, 2 * N_CHANNEL), dtype=jnp.float32)
    out = jax.block_until_ready(bob_forward(x, w_blob, b_blob))
    assert out.shape == (BATCH, M_OUT)

    # Exact-path check (same bf16 matmul semantics as the kernel): tight tolerance.
    ref_bf16 = bob_reference_bf16(x, dense)
    assert jnp.allclose(out, ref_bf16, atol=1e-4, rtol=1e-4), (out, ref_bf16)

    # Module-semantics check (pure f32 PyTorch-faithful reference): bf16-loosened tolerance.
    ref_f32 = bob_reference_f32(x, params)
    assert jnp.allclose(out, ref_f32, atol=5e-2, rtol=5e-2), (out, ref_f32)

    # --- Large batch: exercises multi-tile grid + in-kernel sub-tiling path ---
    B2 = 1000
    x2 = jax.random.normal(kx2, (B2, 2 * N_CHANNEL), dtype=jnp.float32)
    out2 = jax.block_until_ready(bob_forward(x2, w_blob, b_blob))
    assert out2.shape == (B2, M_OUT)
    ref2 = bob_reference_bf16(x2, dense)
    assert jnp.allclose(out2, ref2, atol=1e-4, rtol=1e-4)

    print("KERNEL_OK")
</pallas_src>

<mosaic_0001>
module attributes {stable_mosaic.version = 11 : i64} {
  func.func @bob_kernel(%arg0: i32, %arg1: memref<16x128xbf16, #tpu.memory_space<vmem>>, %arg2: memref<8x128x128xbf16, #tpu.memory_space<vmem>>, %arg3: memref<8x128xf32, #tpu.memory_space<vmem>>, %arg4: memref<16x4xf32, #tpu.memory_space<vmem>>) attributes {dimension_semantics = [#tpu.dimension_semantics<parallel>], iteration_bounds = array<i64: 1>, scalar_prefetch = 0 : i64, scratch_operands = 0 : i64, tpu.core_type = #tpu.core_type<tc>, window_params = [{transform_indices = @transform_0, window_bounds = array<i64: 16, 128>}, {pipeline_mode = #tpu.pipeline_mode<synchronous>, transform_indices = @transform_1, window_bounds = array<i64: 8, 128, 128>}, {pipeline_mode = #tpu.pipeline_mode<synchronous>, transform_indices = @transform_2, window_bounds = array<i64: 8, 128>}, {transform_indices = @transform_3, window_bounds = array<i64: 16, 4>}]} {
    %c0 = arith.constant 0 : index
    %c0_0 = arith.constant 0 : index
    %0 = vector.load %arg3[%c0, %c0_0] : memref<8x128xf32, #tpu.memory_space<vmem>>, vector<8x128xf32>
    %c0_1 = arith.constant 0 : index
    %c0_2 = arith.constant 0 : index
    %1 = vector.load %arg1[%c0_1, %c0_2] : memref<16x128xbf16, #tpu.memory_space<vmem>>, vector<16x128xbf16>
    %c0_3 = arith.constant 0 : index
    %c0_4 = arith.constant 0 : index
    %c0_5 = arith.constant 0 : index
    %2 = vector.load %arg2[%c0_3, %c0_4, %c0_5] : memref<8x128x128xbf16, #tpu.memory_space<vmem>>, vector<1x128x128xbf16>
    %3 = vector.shape_cast %2 : vector<1x128x128xbf16> to vector<128x128xbf16>
    %cst = arith.constant dense<0.000000e+00> : vector<16x128xf32>
    %4 = tpu.matmul %1, %3, %cst {dimension_numbers = #tpu.dot_dimension_numbers<[1], [0], [0], [1], [0, 0, 1, 1], [], []>} : vector<16x128xbf16>, vector<128x128xbf16>, vector<16x128xf32> -> vector<16x128xf32>
    %5 = vector.extract_strided_slice %0 {offsets = [0, 0], sizes = [1, 128], strides = [1, 1]} : vector<8x128xf32> to vector<1x128xf32>
    %6 = vector.broadcast %5 : vector<1x128xf32> to vector<16x128xf32>
    %7 = arith.addf %4, %6 : vector<16x128xf32>
    %8 = math.tanh %7 : vector<16x128xf32>
    %9 = arith.truncf %8 : vector<16x128xf32> to vector<16x128xbf16>
    %c1 = arith.constant 1 : index
    %c0_6 = arith.constant 0 : index
    %c0_7 = arith.constant 0 : index
    %10 = vector.load %arg2[%c1, %c0_6, %c0_7] : memref<8x128x128xbf16, #tpu.memory_space<vmem>>, vector<1x128x128xbf16>
    %11 = vector.shape_cast %10 : vector<1x128x128xbf16> to vector<128x128xbf16>
    %cst_8 = arith.constant dense<0.000000e+00> : vector<16x128xf32>
    %12 = tpu.matmul %9, %11, %cst_8 {dimension_numbers = #tpu.dot_dimension_numbers<[1], [0], [0], [1], [0, 0, 1, 1], [], []>} : vector<16x128xbf16>, vector<128x128xbf16>, vector<16x128xf32> -> vector<16x128xf32>
    %13 = vector.extract_strided_slice %0 {offsets = [1, 0], sizes = [1, 128], strides = [1, 1]} : vector<8x128xf32> to vector<1x128xf32>
    %14 = vector.broadcast %13 : vector<1x128xf32> to vector<16x128xf32>
    %15 = arith.addf %12, %14 : vector<16x128xf32>
    %cst_9 = arith.constant 2.000000e-01 : f32
    %16 = vector.broadcast %cst_9 : f32 to vector<16x128xf32>
    %17 = arith.mulf %16, %15 : vector<16x128xf32>
    %18 = arith.maximumf %15, %17 : vector<16x128xf32>
    %19 = arith.truncf %18 : vector<16x128xf32> to vector<16x128xbf16>
    %c2 = arith.constant 2 : index
    %c0_10 = arith.constant 0 : index
    %c0_11 = arith.constant 0 : index
    %20 = vector.load %arg2[%c2, %c0_10, %c0_11] : memref<8x128x128xbf16, #tpu.memory_space<vmem>>, vector<1x128x128xbf16>
    %21 = vector.shape_cast %20 : vector<1x128x128xbf16> to vector<128x128xbf16>
    %cst_12 = arith.constant dense<0.000000e+00> : vector<16x128xf32>
    %22 = tpu.matmul %19, %21, %cst_12 {dimension_numbers = #tpu.dot_dimension_numbers<[1], [0], [0], [1], [0, 0, 1, 1], [], []>} : vector<16x128xbf16>, vector<128x128xbf16>, vector<16x128xf32> -> vector<16x128xf32>
    %23 = vector.extract_strided_slice %0 {offsets = [2, 0], sizes = [1, 128], strides = [1, 1]} : vector<8x128xf32> to vector<1x128xf32>
    %24 = vector.broadcast %23 : vector<1x128xf32> to vector<16x128xf32>
    %25 = arith.addf %22, %24 : vector<16x128xf32>
    %cst_13 = arith.constant 2.000000e-01 : f32
    %26 = vector.broadcast %cst_13 : f32 to vector<16x128xf32>
    %27 = arith.mulf %26, %25 : vector<16x128xf32>
    %28 = arith.maximumf %25, %27 : vector<16x128xf32>
    %29 = arith.truncf %28 : vector<16x128xf32> to vector<16x128xbf16>
    %c3 = arith.constant 3 : index
    %c0_14 = arith.constant 0 : index
    %c0_15 = arith.constant 0 : index
    %30 = vector.load %arg2[%c3, %c0_14, %c0_15] : memref<8x128x128xbf16, #tpu.memory_space<vmem>>, vector<1x128x128xbf16>
    %31 = vector.shape_cast %30 : vector<1x128x128xbf16> to vector<128x128xbf16>
    %cst_16 = arith.constant dense<0.000000e+00> : vector<16x128xf32>
    %32 = tpu.matmul %29, %31, %cst_16 {dimension_numbers = #tpu.dot_dimension_numbers<[1], [0], [0], [1], [0, 0, 1, 1], [], []>} : vector<16x128xbf16>, vector<128x128xbf16>, vector<16x128xf32> -> vector<16x128xf32>
    %33 = vector.extract_strided_slice %0 {offsets = [3, 0], sizes = [1, 128], strides = [1, 1]} : vector<8x128xf32> to vector<1x128xf32>
    %34 = vector.broadcast %33 : vector<1x128xf32> to vector<16x128xf32>
    %35 = arith.addf %32, %34 : vector<16x128xf32>
    %cst_17 = arith.constant 2.000000e-01 : f32
    %36 = vector.broadcast %cst_17 : f32 to vector<16x128xf32>
    %37 = arith.mulf %36, %35 : vector<16x128xf32>
    %38 = arith.maximumf %35, %37 : vector<16x128xf32>
    %39 = arith.truncf %38 : vector<16x128xf32> to vector<16x128xbf16>
    %c4 = arith.constant 4 : index
    %c0_18 = arith.constant 0 : index
    %c0_19 = arith.constant 0 : index
    %40 = vector.load %arg2[%c4, %c0_18, %c0_19] : memref<8x128x128xbf16, #tpu.memory_space<vmem>>, vector<1x128x128xbf16>
    %41 = vector.shape_cast %40 : vector<1x128x128xbf16> to vector<128x128xbf16>
    %cst_20 = arith.constant dense<0.000000e+00> : vector<16x128xf32>
    %42 = tpu.matmul %39, %41, %cst_20 {dimension_numbers = #tpu.dot_dimension_numbers<[1], [0], [0], [1], [0, 0, 1, 1], [], []>} : vector<16x128xbf16>, vector<128x128xbf16>, vector<16x128xf32> -> vector<16x128xf32>
    %43 = vector.extract_strided_slice %0 {offsets = [4, 0], sizes = [1, 128], strides = [1, 1]} : vector<8x128xf32> to vector<1x128xf32>
    %44 = vector.broadcast %43 : vector<1x128xf32> to vector<16x128xf32>
    %45 = arith.addf %42, %44 : vector<16x128xf32>
    %cst_21 = arith.constant 2.000000e-01 : f32
    %46 = vector.broadcast %cst_21 : f32 to vector<16x128xf32>
    %47 = arith.mulf %46, %45 : vector<16x128xf32>
    %48 = arith.maximumf %45, %47 : vector<16x128xf32>
    %49 = arith.truncf %48 : vector<16x128xf32> to vector<16x128xbf16>
    %c5 = arith.constant 5 : index
    %c0_22 = arith.constant 0 : index
    %c0_23 = arith.constant 0 : index
    %50 = vector.load %arg2[%c5, %c0_22, %c0_23] : memref<8x128x128xbf16, #tpu.memory_space<vmem>>, vector<1x128x128xbf16>
    %51 = vector.shape_cast %50 : vector<1x128x128xbf16> to vector<128x128xbf16>
    %cst_24 = arith.constant dense<0.000000e+00> : vector<16x128xf32>
    %52 = tpu.matmul %49, %51, %cst_24 {dimension_numbers = #tpu.dot_dimension_numbers<[1], [0], [0], [1], [0, 0, 1, 1], [], []>} : vector<16x128xbf16>, vector<128x128xbf16>, vector<16x128xf32> -> vector<16x128xf32>
    %53 = vector.extract_strided_slice %0 {offsets = [5, 0], sizes = [1, 128], strides = [1, 1]} : vector<8x128xf32> to vector<1x128xf32>
    %54 = vector.broadcast %53 : vector<1x128xf32> to vector<16x128xf32>
    %55 = arith.addf %52, %54 : vector<16x128xf32>
    %cst_25 = arith.constant 2.000000e-01 : f32
    %56 = vector.broadcast %cst_25 : f32 to vector<16x128xf32>
    %57 = arith.mulf %56, %55 : vector<16x128xf32>
    %58 = arith.maximumf %55, %57 : vector<16x128xf32>
    %59 = arith.truncf %58 : vector<16x128xf32> to vector<16x128xbf16>
    %c6 = arith.constant 6 : index
    %c0_26 = arith.constant 0 : index
    %c0_27 = arith.constant 0 : index
    %60 = vector.load %arg2[%c6, %c0_26, %c0_27] : memref<8x128x128xbf16, #tpu.memory_space<vmem>>, vector<1x128x128xbf16>
    %61 = vector.shape_cast %60 : vector<1x128x128xbf16> to vector<128x128xbf16>
    %cst_28 = arith.constant dense<0.000000e+00> : vector<16x128xf32>
    %62 = tpu.matmul %59, %61, %cst_28 {dimension_numbers = #tpu.dot_dimension_numbers<[1], [0], [0], [1], [0, 0, 1, 1], [], []>} : vector<16x128xbf16>, vector<128x128xbf16>, vector<16x128xf32> -> vector<16x128xf32>
    %63 = vector.extract_strided_slice %0 {offsets = [6, 0], sizes = [1, 128], strides = [1, 1]} : vector<8x128xf32> to vector<1x128xf32>
    %64 = vector.broadcast %63 : vector<1x128xf32> to vector<16x128xf32>
    %65 = arith.addf %62, %64 : vector<16x128xf32>
    %66 = math.tanh %65 : vector<16x128xf32>
    %67 = arith.truncf %66 : vector<16x128xf32> to vector<16x128xbf16>
    %c7 = arith.constant 7 : index
    %c0_29 = arith.constant 0 : index
    %c0_30 = arith.constant 0 : index
    %68 = vector.load %arg2[%c7, %c0_29, %c0_30] : memref<8x128x128xbf16, #tpu.memory_space<vmem>>, vector<1x128x128xbf16>
    %69 = vector.shape_cast %68 : vector<1x128x128xbf16> to vector<128x128xbf16>
    %cst_31 = arith.constant dense<0.000000e+00> : vector<16x128xf32>
    %70 = tpu.matmul %67, %69, %cst_31 {dimension_numbers = #tpu.dot_dimension_numbers<[1], [0], [0], [1], [0, 0, 1, 1], [], []>} : vector<16x128xbf16>, vector<128x128xbf16>, vector<16x128xf32> -> vector<16x128xf32>
    %71 = vector.extract_strided_slice %0 {offsets = [7, 0], sizes = [1, 128], strides = [1, 1]} : vector<8x128xf32> to vector<1x128xf32>
    %72 = vector.broadcast %71 : vector<1x128xf32> to vector<16x128xf32>
    %73 = arith.addf %70, %72 : vector<16x128xf32>
    %74 = vector.extract_strided_slice %73 {offsets = [0, 0], sizes = [16, 4], strides = [1, 1]} : vector<16x128xf32> to vector<16x4xf32>
    %c0_32 = arith.constant 0 : index
    %c0_33 = arith.constant 0 : index
    %75 = vector.load %arg4[%c0_32, %c0_33] : memref<16x4xf32, #tpu.memory_space<vmem>>, vector<16x4xf32>
    tpu.vector_store %arg4[%c0_32, %c0_33], %74 {strides = array<i32>} : memref<16x4xf32, #tpu.memory_space<vmem>>, vector<16x4xf32>,
    return
  }
  func.func @transform_0(%arg0: i32) -> (i32, i32) {
    %c0_i32 = arith.constant 0 : i32
    %c0_i32_0 = arith.constant 0 : i32
    return %arg0, %c0_i32 : i32, i32
  }
  func.func @transform_1(%arg0: i32) -> (i32, i32, i32) {
    %c0_i32 = arith.constant 0 : i32
    %c0_i32_0 = arith.constant 0 : i32
    %c0_i32_1 = arith.constant 0 : i32
    %c0_i32_2 = arith.constant 0 : i32
    return %c0_i32, %c0_i32_0, %c0_i32_1 : i32, i32, i32
  }
  func.func @transform_2(%arg0: i32) -> (i32, i32) {
    %c0_i32 = arith.constant 0 : i32
    %c0_i32_0 = arith.constant 0 : i32
    %c0_i32_1 = arith.constant 0 : i32
    return %c0_i32, %c0_i32_0 : i32, i32
  }
  func.func @transform_3(%arg0: i32) -> (i32, i32) {
    %c0_i32 = arith.constant 0 : i32
    %c0_i32_0 = arith.constant 0 : i32
    return %arg0, %c0_i32 : i32, i32
  }
}

</mosaic_0001>

<llo_original>
// kernel: bob_forward.1
$region0: #{bob_forward.1}
  #allocation0 [shape = 'u32[]', space=smem, size = 0x4, offset = 0x4, fixed_abs, tag = 'smem constant byte address 0x4 - core index']
  #allocation1 [shape = 'u32[144,128]{1,0:T(1,128)}', space=vmem, size = 0x12000, scoped, tag = 'internal scratch']
  %s0 = inlined_call_operand.vmem [shape: bf16[16,128], index: 0, kind: input, shape index: {}]
  %s1 = inlined_call_operand.hbm [shape: bf16[8,128,128], index: 1, kind: input, shape index: {}]
  %s2 = inlined_call_operand.vmem [shape: f32[8,128], index: 2, kind: input, shape index: {}]
  %s3 = inlined_call_operand.vmem [shape: f32[16,4], index: 3, kind: output, shape index: {}]
  %s4 = sld [smem:[#allocation0]]
  $region26: #{bob_forward.1} parent=0
    _
  %s6 = ssub.s32 1, %s4
  %s7 = scalar_select 0, %s6, %s4
  $region1: #{bob_forward.1} parent=0
    #allocation2 [shape = 'u8[262144]{0}', space=vmem, size = 0x40000, scoped, tag = 'input window, operand 1, single buffered']
    #allocation3 [shape = 's32[1]{0}', space=sflag, size = 0x4, scoped, tag = 'scoped memory for bob_forward.1']
    %8 = vsyncpa [#allocation3], 0
    // Predicated region
    $region2: #{bob_forward.1} parent=1 // pred_check
      _
    $region3: #{bob_forward.1} parent=1 // pred_check_branch
      %10 = sbr.rel (0) target = $region5
    $region4: #{bob_forward.1} parent=1 // pred_region
      _
    $region5: #{bob_forward.1} parent=1 // pred_fallthru
      _
    // Predicated region
    $region6: #{bob_forward.1} parent=1 // pred_check
      _
    $region7: #{bob_forward.1} parent=1 // pred_check_branch
      %12 = sbr.rel (0) target = $region9
    $region8: #{bob_forward.1} parent=1 // pred_region
      %s14 = ssub.s32 8192, 8192
      %15 = vsyncadd [#allocation3], %s14
      %s16 = sshll.u32 [#allocation2], 4
      %s17 = int_to_ptr.vmem [resolvable:$true] %s16
      %22 = dma.hbm_to_vmem [thread:$0]  %s1, 8192, %s17, [#allocation3], 64, 64, 4
    $region9: #{bob_forward.1} parent=1 // pred_fallthru
      _
    // Predicated region
    $region10: #{bob_forward.1} parent=1 // pred_check
      _
    $region11: #{bob_forward.1} parent=1 // pred_check_branch
      %24 = sbr.rel (0) target = $region13
    $region12: #{bob_forward.1} parent=1 // pred_region
      _
    $region13: #{bob_forward.1} parent=1 // pred_fallthru
      _
    // Predicated region
    $region14: #{bob_forward.1} parent=1 // pred_check
      _
    $region15: #{bob_forward.1} parent=1 // pred_check_branch
      %26 = sbr.rel (0) target = $region17
    $region16: #{bob_forward.1} parent=1 // pred_region
      %27 = dma.done [#allocation3], 8192
    $region17: #{bob_forward.1} parent=1 // pred_fallthru
      _
    %v29 = vld [vmem:[%s2] sm:$0xff]
    %v30 = vld [vmem:[%s0] sm:$0xf]
    %v31 = vld [vmem:[%s0 + $0x4] sm:$0xf]
    %v32 = vld [vmem:[#allocation2] sm:$0xf]
    %v33 = vld [vmem:[#allocation2 + $0x4] sm:$0xf]
    %v34 = vld [vmem:[#allocation2 + $0x8] sm:$0xf]
    %v35 = vld [vmem:[#allocation2 + $0xc] sm:$0xf]
    %v36 = vld [vmem:[#allocation2 + $0x10] sm:$0xf]
    %v37 = vld [vmem:[#allocation2 + $0x14] sm:$0xf]
    %v38 = vld [vmem:[#allocation2 + $0x18] sm:$0xf]
    %v39 = vld [vmem:[#allocation2 + $0x1c] sm:$0xf]
    %v40 = vld [vmem:[#allocation2 + $0x20] sm:$0xf]
    %v41 = vld [vmem:[#allocation2 + $0x24] sm:$0xf]
    %v42 = vld [vmem:[#allocation2 + $0x28] sm:$0xf]
    %v43 = vld [vmem:[#allocation2 + $0x2c] sm:$0xf]
    %v44 = vld [vmem:[#allocation2 + $0x30] sm:$0xf]
    %v45 = vld [vmem:[#allocation2 + $0x34] sm:$0xf]
    %v46 = vld [vmem:[#allocation2 + $0x38] sm:$0xf]
    %v47 = vld [vmem:[#allocation2 + $0x3c] sm:$0xf]
    %v48 = vlaneseq
    %v49 = vshrl.u32 %v48, 7
    %v50 = vsub.s32 0, %v49
    %v51 = vrot.slane %v29, %v50
    %v54 = vunpack.c.l.b16 %v30
    %v55 = vunpack.c.l.b16 %v31
    %v56 = vpack.c.b16 %v55, %v54
    %v74 = vunpack.c.l.b16 %v32
    %v75 = vunpack.c.l.b16 %v33
    %v76 = vunpack.c.l.b16 %v34
    %v77 = vunpack.c.l.b16 %v35
    %v78 = vunpack.c.l.b16 %v36
    %v79 = vunpack.c.l.b16 %v37
    %v80 = vunpack.c.l.b16 %v38
    %v81 = vunpack.c.l.b16 %v39
    %v82 = vunpack.c.l.b16 %v40
    %v83 = vunpack.c.l.b16 %v41
    %v84 = vunpack.c.l.b16 %v42
    %v85 = vunpack.c.l.b16 %v43
    %v86 = vunpack.c.l.b16 %v44
    %v87 = vunpack.c.l.b16 %v45
    %v88 = vunpack.c.l.b16 %v46
    %v89 = vunpack.c.l.b16 %v47
    %v90 = vpack.c.b16 %v75, %v74
    %v91 = vpack.c.b16 %v77, %v76
    %v92 = vpack.c.b16 %v79, %v78
    %v93 = vpack.c.b16 %v81, %v80
    %v94 = vpack.c.b16 %v83, %v82
    %v95 = vpack.c.b16 %v85, %v84
    %v96 = vpack.c.b16 %v87, %v86
    %v97 = vpack.c.b16 %v89, %v88
    %106 = vmatprep.subr.bf16.mxu0 0
    %107 = vmatpush1.bf16.msra.mxu0 %v97
    %108 = vmatprep.subr.bf16.mxu0 0
    %109 = vmatpush1.bf16.msra.mxu0 %v96
    %110 = vmatprep.subr.bf16.mxu0 0
    %111 = vmatpush1.bf16.msra.mxu0 %v95
    %112 = vmatprep.subr.bf16.mxu0 0
    %113 = vmatpush1.bf16.msra.mxu0 %v94
    %114 = vmatprep.subr.bf16.mxu0 0
    %115 = vmatpush1.bf16.msra.mxu0 %v93
    %116 = vmatprep.subr.bf16.mxu0 0
    %117 = vmatpush1.bf16.msra.mxu0 %v92
    %118 = vmatprep.subr.bf16.mxu0 0
    %119 = vmatpush1.bf16.msra.mxu0 %v91
    %120 = vmatprep.subr.bf16.mxu0 0
    %121 = vmatpush1.bf16.msra.mxu0 %v90
    %122 = vmatprep.subr.bf16.mxu0 0
    %123 = vmatpush2.bf16.msra.mxu0 0
    %124 = vmatprep.subr.bf16.mxu0 0
    %125 = vmatpush2.bf16.msra.mxu0 0
    %126 = vmatprep.subr.bf16.mxu0 0
    %127 = vmatpush2.bf16.msra.mxu0 0
    %128 = vmatprep.subr.bf16.mxu0 0
    %129 = vmatpush2.bf16.msra.mxu0 0
    %130 = vmatprep.subr.bf16.mxu0 0
    %131 = vmatpush2.bf16.msra.mxu0 0
    %132 = vmatprep.subr.bf16.mxu0 0
    %133 = vmatpush2.bf16.msra.mxu0 0
    %134 = vmatprep.subr.bf16.mxu0 0
    %135 = vmatpush2.bf16.msra.mxu0 0
    %136 = vmatprep.subr.bf16.mxu0 0
    %137 = vmatpush2.bf16.msra.mxu0 0
    %138 = vmatprep.mubr.bf16.mxu0 0
    %139 = vmatmul.mubr.bf16.gmra.mxu0 %v56
    %v140 = vpop.f32.mrf.mxu0
    %v141 = vadd.f32 %v51, %v140
    %v142 = vpop.f32.mrf.mxu0
    %v143 = vpop.f32.mrf.mxu0
    %v144 = vadd.f32 %v51, %v143
    %v145 = vpop.f32.mrf.mxu0
    %146 = vdwg.mxu0
    %v147 = vtanh.pop %v141
    %v148 = vtanh.pop %v144
    %v149 = vpack.c.bf16 %v148, %v147
    %s150 = scalar_lea.vmem [#allocation2], 64
    %v151 = vld [vmem:[%s150] sm:$0xf]
    %v152 = vld [vmem:[%s150 + $0x4] sm:$0xf]
    %v153 = vld [vmem:[%s150 + $0x8] sm:$0xf]
    %v154 = vld [vmem:[%s150 + $0xc] sm:$0xf]
    %v155 = vld [vmem:[%s150 + $0x10] sm:$0xf]
    %v156 = vld [vmem:[%s150 + $0x14] sm:$0xf]
    %v157 = vld [vmem:[%s150 + $0x18] sm:$0xf]
    %v158 = vld [vmem:[%s150 + $0x1c] sm:$0xf]
    %v159 = vld [vmem:[%s150 + $0x20] sm:$0xf]
    %v160 = vld [vmem:[%s150 + $0x24] sm:$0xf]
    %v161 = vld [vmem:[%s150 + $0x28] sm:$0xf]
    %v162 = vld [vmem:[%s150 + $0x2c] sm:$0xf]
    %v163 = vld [vmem:[%s150 + $0x30] sm:$0xf]
    %v164 = vld [vmem:[%s150 + $0x34] sm:$0xf]
    %v165 = vld [vmem:[%s150 + $0x38] sm:$0xf]
    %v166 = vld [vmem:[%s150 + $0x3c] sm:$0xf]
    %v167 = vlaneseq
    %v168 = vshrl.u32 %v167, 7
    %v169 = vsub.s32 1, %v168
    %v170 = vrot.slane %v29, %v169
    %v187 = vunpack.c.l.b16 %v151
    %v188 = vunpack.c.l.b16 %v152
    %v189 = vunpack.c.l.b16 %v153
    %v190 = vunpack.c.l.b16 %v154
    %v191 = vunpack.c.l.b16 %v155
    %v192 = vunpack.c.l.b16 %v156
    %v193 = vunpack.c.l.b16 %v157
    %v194 = vunpack.c.l.b16 %v158
    %v195 = vunpack.c.l.b16 %v159
    %v196 = vunpack.c.l.b16 %v160
    %v197 = vunpack.c.l.b16 %v161
    %v198 = vunpack.c.l.b16 %v162
    %v199 = vunpack.c.l.b16 %v163
    %v200 = vunpack.c.l.b16 %v164
    %v201 = vunpack.c.l.b16 %v165
    %v202 = vunpack.c.l.b16 %v166
    %v203 = vpack.c.b16 %v188, %v187
    %v204 = vpack.c.b16 %v190, %v189
    %v205 = vpack.c.b16 %v192, %v191
    %v206 = vpack.c.b16 %v194, %v193
    %v207 = vpack.c.b16 %v196, %v195
    %v208 = vpack.c.b16 %v198, %v197
    %v209 = vpack.c.b16 %v200, %v199
    %v210 = vpack.c.b16 %v202, %v201
    %219 = vmatprep.subr.bf16.mxu0 0
    %220 = vmatpush1.bf16.msra.mxu0 %v210
    %221 = vmatprep.subr.bf16.mxu0 0
    %222 = vmatpush1.bf16.msra.mxu0 %v209
    %223 = vmatprep.subr.bf16.mxu0 0
    %224 = vmatpush1.bf16.msra.mxu0 %v208
    %225 = vmatprep.subr.bf16.mxu0 0
    %226 = vmatpush1.bf16.msra.mxu0 %v207
    %227 = vmatprep.subr.bf16.mxu0 0
    %228 = vmatpush1.bf16.msra.mxu0 %v206
    %229 = vmatprep.subr.bf16.mxu0 0
    %230 = vmatpush1.bf16.msra.mxu0 %v205
    %231 = vmatprep.subr.bf16.mxu0 0
    %232 = vmatpush1.bf16.msra.mxu0 %v204
    %233 = vmatprep.subr.bf16.mxu0 0
    %234 = vmatpush1.bf16.msra.mxu0 %v203
    %235 = vmatprep.subr.bf16.mxu0 0
    %236 = vmatpush2.bf16.msra.mxu0 0
    %237 = vmatprep.subr.bf16.mxu0 0
    %238 = vmatpush2.bf16.msra.mxu0 0
    %239 = vmatprep.subr.bf16.mxu0 0
    %240 = vmatpush2.bf16.msra.mxu0 0
    %241 = vmatprep.subr.bf16.mxu0 0
    %242 = vmatpush2.bf16.msra.mxu0 0
    %243 = vmatprep.subr.bf16.mxu0 0
    %244 = vmatpush2.bf16.msra.mxu0 0
    %245 = vmatprep.subr.bf16.mxu0 0
    %246 = vmatpush2.bf16.msra.mxu0 0
    %247 = vmatprep.subr.bf16.mxu0 0
    %248 = vmatpush2.bf16.msra.mxu0 0
    %249 = vmatprep.subr.bf16.mxu0 0
    %250 = vmatpush2.bf16.msra.mxu0 0
    %251 = vmatprep.mubr.bf16.mxu0 0
    %252 = vmatmul.mubr.bf16.gmra.mxu0 %v149
    %v253 = vpop.f32.mrf.mxu0
    %v254 = vadd.f32 %v170, %v253
    %v255 = vpop.f32.mrf.mxu0
    %v256 = vpop.f32.mrf.mxu0
    %v257 = vadd.f32 %v170, %v256
    %v258 = vpop.f32.mrf.mxu0
    %259 = vdwg.mxu0
    %v260 = vmul.f32 %v254, 0.2
    %v261 = vmul.f32 %v257, 0.2
    %v262 = vmax.f32 %v254, %v260
    %v263 = vmax.f32 %v257, %v261
    %v264 = vpack.c.bf16 %v263, %v262
    %s265 = scalar_lea.vmem [#allocation2], 128
    %v266 = vld [vmem:[%s265] sm:$0xf]
    %v267 = vld [vmem:[%s265 + $0x4] sm:$0xf]
    %v268 = vld [vmem:[%s265 + $0x8] sm:$0xf]
    %v269 = vld [vmem:[%s265 + $0xc] sm:$0xf]
    %v270 = vld [vmem:[%s265 + $0x10] sm:$0xf]
    %v271 = vld [vmem:[%s265 + $0x14] sm:$0xf]
    %v272 = vld [vmem:[%s265 + $0x18] sm:$0xf]
    %v273 = vld [vmem:[%s265 + $0x1c] sm:$0xf]
    %v274 = vld [vmem:[%s265 + $0x20] sm:$0xf]
    %v275 = vld [vmem:[%s265 + $0x24] sm:$0xf]
    %v276 = vld [vmem:[%s265 + $0x28] sm:$0xf]
    %v277 = vld [vmem:[%s265 + $0x2c] sm:$0xf]
    %v278 = vld [vmem:[%s265 + $0x30] sm:$0xf]
    %v279 = vld [vmem:[%s265 + $0x34] sm:$0xf]
    %v280 = vld [vmem:[%s265 + $0x38] sm:$0xf]
    %v281 = vld [vmem:[%s265 + $0x3c] sm:$0xf]
    %v282 = vlaneseq
    %v283 = vshrl.u32 %v282, 7
    %v284 = vsub.s32 2, %v283
    %v285 = vrot.slane %v29, %v284
    %v302 = vunpack.c.l.b16 %v266
    %v303 = vunpack.c.l.b16 %v267
    %v304 = vunpack.c.l.b16 %v268
    %v305 = vunpack.c.l.b16 %v269
    %v306 = vunpack.c.l.b16 %v270
    %v307 = vunpack.c.l.b16 %v271
    %v308 = vunpack.c.l.b16 %v272
    %v309 = vunpack.c.l.b16 %v273
    %v310 = vunpack.c.l.b16 %v274
    %v311 = vunpack.c.l.b16 %v275
    %v312 = vunpack.c.l.b16 %v276
    %v313 = vunpack.c.l.b16 %v277
    %v314 = vunpack.c.l.b16 %v278
    %v315 = vunpack.c.l.b16 %v279
    %v316 = vunpack.c.l.b16 %v280
    %v317 = vunpack.c.l.b16 %v281
    %v318 = vpack.c.b16 %v303, %v302
    %v319 = vpack.c.b16 %v305, %v304
    %v320 = vpack.c.b16 %v307, %v306
    %v321 = vpack.c.b16 %v309, %v308
    %v322 = vpack.c.b16 %v311, %v310
    %v323 = vpack.c.b16 %v313, %v312
    %v324 = vpack.c.b16 %v315, %v314
    %v325 = vpack.c.b16 %v317, %v316
    %334 = vmatprep.subr.bf16.mxu0 0
    %335 = vmatpush1.bf16.msra.mxu0 %v325
    %336 = vmatprep.subr.bf16.mxu0 0
    %337 = vmatpush1.bf16.msra.mxu0 %v324
    %338 = vmatprep.subr.bf16.mxu0 0
    %339 = vmatpush1.bf16.msra.mxu0 %v323
    %340 = vmatprep.subr.bf16.mxu0 0
    %341 = vmatpush1.bf16.msra.mxu0 %v322
    %342 = vmatprep.subr.bf16.mxu0 0
    %343 = vmatpush1.bf16.msra.mxu0 %v321
    %344 = vmatprep.subr.bf16.mxu0 0
    %345 = vmatpush1.bf16.msra.mxu0 %v320
    %346 = vmatprep.subr.bf16.mxu0 0
    %347 = vmatpush1.bf16.msra.mxu0 %v319
    %348 = vmatprep.subr.bf16.mxu0 0
    %349 = vmatpush1.bf16.msra.mxu0 %v318
    %350 = vmatprep.subr.bf16.mxu0 0
    %351 = vmatpush2.bf16.msra.mxu0 0
    %352 = vmatprep.subr.bf16.mxu0 0
    %353 = vmatpush2.bf16.msra.mxu0 0
    %354 = vmatprep.subr.bf16.mxu0 0
    %355 = vmatpush2.bf16.msra.mxu0 0
    %356 = vmatprep.subr.bf16.mxu0 0
    %357 = vmatpush2.bf16.msra.mxu0 0
    %358 = vmatprep.subr.bf16.mxu0 0
    %359 = vmatpush2.bf16.msra.mxu0 0
    %360 = vmatprep.subr.bf16.mxu0 0
    %361 = vmatpush2.bf16.msra.mxu0 0
    %362 = vmatprep.subr.bf16.mxu0 0
    %363 = vmatpush2.bf16.msra.mxu0 0
    %364 = vmatprep.subr.bf16.mxu0 0
    %365 = vmatpush2.bf16.msra.mxu0 0
    %366 = vmatprep.mubr.bf16.mxu0 0
    %367 = vmatmul.mubr.bf16.gmra.mxu0 %v264
    %v368 = vpop.f32.mrf.mxu0
    %v369 = vadd.f32 %v285, %v368
    %v370 = vpop.f32.mrf.mxu0
    %v371 = vpop.f32.mrf.mxu0
    %v372 = vadd.f32 %v285, %v371
    %v373 = vpop.f32.mrf.mxu0
    %374 = vdwg.mxu0
    %v375 = vmul.f32 %v369, 0.2
    %v376 = vmul.f32 %v372, 0.2
    %v377 = vmax.f32 %v369, %v375
    %v378 = vmax.f32 %v372, %v376
    %v379 = vpack.c.bf16 %v378, %v377
    %s380 = scalar_lea.vmem [#allocation2], 192
    %v381 = vld [vmem:[%s380] sm:$0xf]
    %v382 = vld [vmem:[%s380 + $0x4] sm:$0xf]
    %v383 = vld [vmem:[%s380 + $0x8] sm:$0xf]
    %v384 = vld [vmem:[%s380 + $0xc] sm:$0xf]
    %v385 = vld [vmem:[%s380 + $0x10] sm:$0xf]
    %v386 = vld [vmem:[%s380 + $0x14] sm:$0xf]
    %v387 = vld [vmem:[%s380 + $0x18] sm:$0xf]
    %v388 = vld [vmem:[%s380 + $0x1c] sm:$0xf]
    %v389 = vld [vmem:[%s380 + $0x20] sm:$0xf]
    %v390 = vld [vmem:[%s380 + $0x24] sm:$0xf]
    %v391 = vld [vmem:[%s380 + $0x28] sm:$0xf]
    %v392 = vld [vmem:[%s380 + $0x2c] sm:$0xf]
    %v393 = vld [vmem:[%s380 + $0x30] sm:$0xf]
    %v394 = vld [vmem:[%s380 + $0x34] sm:$0xf]
    %v395 = vld [vmem:[%s380 + $0x38] sm:$0xf]
    %v396 = vld [vmem:[%s380 + $0x3c] sm:$0xf]
    %v397 = vlaneseq
    %v398 = vshrl.u32 %v397, 7
    %v399 = vsub.s32 3, %v398
    %v400 = vrot.slane %v29, %v399
    %v417 = vunpack.c.l.b16 %v381
    %v418 = vunpack.c.l.b16 %v382
    %v419 = vunpack.c.l.b16 %v383
    %v420 = vunpack.c.l.b16 %v384
    %v421 = vunpack.c.l.b16 %v385
    %v422 = vunpack.c.l.b16 %v386
    %v423 = vunpack.c.l.b16 %v387
    %v424 = vunpack.c.l.b16 %v388
    %v425 = vunpack.c.l.b16 %v389
    %v426 = vunpack.c.l.b16 %v390
    %v427 = vunpack.c.l.b16 %v391
    %v428 = vunpack.c.l.b16 %v392
    %v429 = vunpack.c.l.b16 %v393
    %v430 = vunpack.c.l.b16 %v394
    %v431 = vunpack.c.l.b16 %v395
    %v432 = vunpack.c.l.b16 %v396
    %v433 = vpack.c.b16 %v418, %v417
    %v434 = vpack.c.b16 %v420, %v419
    %v435 = vpack.c.b16 %v422, %v421
    %v436 = vpack.c.b16 %v424, %v423
    %v437 = vpack.c.b16 %v426, %v425
    %v438 = vpack.c.b16 %v428, %v427
    %v439 = vpack.c.b16 %v430, %v429
    %v440 = vpack.c.b16 %v432, %v431
    %449 = vmatprep.subr.bf16.mxu0 0
    %450 = vmatpush1.bf16.msra.mxu0 %v440
    %451 = vmatprep.subr.bf16.mxu0 0
    %452 = vmatpush1.bf16.msra.mxu0 %v439
    %453 = vmatprep.subr.bf16.mxu0 0
    %454 = vmatpush1.bf16.msra.mxu0 %v438
    %455 = vmatprep.subr.bf16.mxu0 0
    %456 = vmatpush1.bf16.msra.mxu0 %v437
    %457 = vmatprep.subr.bf16.mxu0 0
    %458 = vmatpush1.bf16.msra.mxu0 %v436
    %459 = vmatprep.subr.bf16.mxu0 0
    %460 = vmatpush1.bf16.msra.mxu0 %v435
    %461 = vmatprep.subr.bf16.mxu0 0
    %462 = vmatpush1.bf16.msra.mxu0 %v434
    %463 = vmatprep.subr.bf16.mxu0 0
    %464 = vmatpush1.bf16.msra.mxu0 %v433
    %465 = vmatprep.subr.bf16.mxu0 0
    %466 = vmatpush2.bf16.msra.mxu0 0
    %467 = vmatprep.subr.bf16.mxu0 0
    %468 = vmatpush2.bf16.msra.mxu0 0
    %469 = vmatprep.subr.bf16.mxu0 0
    %470 = vmatpush2.bf16.msra.mxu0 0
    %471 = vmatprep.subr.bf16.mxu0 0
    %472 = vmatpush2.bf16.msra.mxu0 0
    %473 = vmatprep.subr.bf16.mxu0 0
    %474 = vmatpush2.bf16.msra.mxu0 0
    %475 = vmatprep.subr.bf16.mxu0 0
    %476 = vmatpush2.bf16.msra.mxu0 0
    %477 = vmatprep.subr.bf16.mxu0 0
    %478 = vmatpush2.bf16.msra.mxu0 0
    %479 = vmatprep.subr.bf16.mxu0 0
    %480 = vmatpush2.bf16.msra.mxu0 0
    %481 = vmatprep.mubr.bf16.mxu0 0
    %482 = vmatmul.mubr.bf16.gmra.mxu0 %v379
    %v483 = vpop.f32.mrf.mxu0
    %v484 = vadd.f32 %v400, %v483
    %v485 = vpop.f32.mrf.mxu0
    %v486 = vpop.f32.mrf.mxu0
    %v487 = vadd.f32 %v400, %v486
    %v488 = vpop.f32.mrf.mxu0
    %489 = vdwg.mxu0
    %v490 = vmul.f32 %v484, 0.2
    %v491 = vmul.f32 %v487, 0.2
    %v492 = vmax.f32 %v484, %v490
    %v493 = vmax.f32 %v487, %v491
    %v494 = vpack.c.bf16 %v493, %v492
    %s495 = scalar_lea.vmem [#allocation2], 256
    %v496 = vld [vmem:[%s495] sm:$0xf]
    %v497 = vld [vmem:[%s495 + $0x4] sm:$0xf]
    %v498 = vld [vmem:[%s495 + $0x8] sm:$0xf]
    %v499 = vld [vmem:[%s495 + $0xc] sm:$0xf]
    %v500 = vld [vmem:[%s495 + $0x10] sm:$0xf]
    %v501 = vld [vmem:[%s495 + $0x14] sm:$0xf]
    %v502 = vld [vmem:[%s495 + $0x18] sm:$0xf]
    %v503 = vld [vmem:[%s495 + $0x1c] sm:$0xf]
    %v504 = vld [vmem:[%s495 + $0x20] sm:$0xf]
    %v505 = vld [vmem:[%s495 + $0x24] sm:$0xf]
    %v506 = vld [vmem:[%s495 + $0x28] sm:$0xf]
    %v507 = vld [vmem:[%s495 + $0x2c] sm:$0xf]
    %v508 = vld [vmem:[%s495 + $0x30] sm:$0xf]
    %v509 = vld [vmem:[%s495 + $0x34] sm:$0xf]
    %v510 = vld [vmem:[%s495 + $0x38] sm:$0xf]
    %v511 = vld [vmem:[%s495 + $0x3c] sm:$0xf]
    %v512 = vlaneseq
    %v513 = vshrl.u32 %v512, 7
    %v514 = vsub.s32 4, %v513
    %v515 = vrot.slane %v29, %v514
    %v532 = vunpack.c.l.b16 %v496
    %v533 = vunpack.c.l.b16 %v497
    %v534 = vunpack.c.l.b16 %v498
    %v535 = vunpack.c.l.b16 %v499
    %v536 = vunpack.c.l.b16 %v500
    %v537 = vunpack.c.l.b16 %v501
    %v538 = vunpack.c.l.b16 %v502
    %v539 = vunpack.c.l.b16 %v503
    %v540 = vunpack.c.l.b16 %v504
    %v541 = vunpack.c.l.b16 %v505
    %v542 = vunpack.c.l.b16 %v506
    %v543 = vunpack.c.l.b16 %v507
    %v544 = vunpack.c.l.b16 %v508
    %v545 = vunpack.c.l.b16 %v509
    %v546 = vunpack.c.l.b16 %v510
    %v547 = vunpack.c.l.b16 %v511
    %v548 = vpack.c.b16 %v533, %v532
    %v549 = vpack.c.b16 %v535, %v534
    %v550 = vpack.c.b16 %v537, %v536
    %v551 = vpack.c.b16 %v539, %v538
    %v552 = vpack.c.b16 %v541, %v540
    %v553 = vpack.c.b16 %v543, %v542
    %v554 = vpack.c.b16 %v545, %v544
    %v555 = vpack.c.b16 %v547, %v546
    %564 = vmatprep.subr.bf16.mxu0 0
    %565 = vmatpush1.bf16.msra.mxu0 %v555
    %566 = vmatprep.subr.bf16.mxu0 0
    %567 = vmatpush1.bf16.msra.mxu0 %v554
    %568 = vmatprep.subr.bf16.mxu0 0
    %569 = vmatpush1.bf16.msra.mxu0 %v553
    %570 = vmatprep.subr.bf16.mxu0 0
    %571 = vmatpush1.bf16.msra.mxu0 %v552
    %572 = vmatprep.subr.bf16.mxu0 0
    %573 = vmatpush1.bf16.msra.mxu0 %v551
    %574 = vmatprep.subr.bf16.mxu0 0
    %575 = vmatpush1.bf16.msra.mxu0 %v550
    %576 = vmatprep.subr.bf16.mxu0 0
    %577 = vmatpush1.bf16.msra.mxu0 %v549
    %578 = vmatprep.subr.bf16.mxu0 0
    %579 = vmatpush1.bf16.msra.mxu0 %v548
    %580 = vmatprep.subr.bf16.mxu0 0
    %581 = vmatpush2.bf16.msra.mxu0 0
    %582 = vmatprep.subr.bf16.mxu0 0
    %583 = vmatpush2.bf16.msra.mxu0 0
    %584 = vmatprep.subr.bf16.mxu0 0
    %585 = vmatpush2.bf16.msra.mxu0 0
    %586 = vmatprep.subr.bf16.mxu0 0
    %587 = vmatpush2.bf16.msra.mxu0 0
    %588 = vmatprep.subr.bf16.mxu0 0
    %589 = vmatpush2.bf16.msra.mxu0 0
    %590 = vmatprep.subr.bf16.mxu0 0
    %591 = vmatpush2.bf16.msra.mxu0 0
    %592 = vmatprep.subr.bf16.mxu0 0
    %593 = vmatpush2.bf16.msra.mxu0 0
    %594 = vmatprep.subr.bf16.mxu0 0
    %595 = vmatpush2.bf16.msra.mxu0 0
    %596 = vmatprep.mubr.bf16.mxu0 0
    %597 = vmatmul.mubr.bf16.gmra.mxu0 %v494
    %v598 = vpop.f32.mrf.mxu0
    %v599 = vadd.f32 %v515, %v598
    %v600 = vpop.f32.mrf.mxu0
    %v601 = vpop.f32.mrf.mxu0
    %v602 = vadd.f32 %v515, %v601
    %v603 = vpop.f32.mrf.mxu0
    %604 = vdwg.mxu0
    %v605 = vmul.f32 %v599, 0.2
    %v606 = vmul.f32 %v602, 0.2
    %v607 = vmax.f32 %v599, %v605
    %v608 = vmax.f32 %v602, %v606
    %v609 = vpack.c.bf16 %v608, %v607
    %s610 = scalar_lea.vmem [#allocation2], 320
    %v611 = vld [vmem:[%s610] sm:$0xf]
    %v612 = vld [vmem:[%s610 + $0x4] sm:$0xf]
    %v613 = vld [vmem:[%s610 + $0x8] sm:$0xf]
    %v614 = vld [vmem:[%s610 + $0xc] sm:$0xf]
    %v615 = vld [vmem:[%s610 + $0x10] sm:$0xf]
    %v616 = vld [vmem:[%s610 + $0x14] sm:$0xf]
    %v617 = vld [vmem:[%s610 + $0x18] sm:$0xf]
    %v618 = vld [vmem:[%s610 + $0x1c] sm:$0xf]
    %v619 = vld [vmem:[%s610 + $0x20] sm:$0xf]
    %v620 = vld [vmem:[%s610 + $0x24] sm:$0xf]
    %v621 = vld [vmem:[%s610 + $0x28] sm:$0xf]
    %v622 = vld [vmem:[%s610 + $0x2c] sm:$0xf]
    %v623 = vld [vmem:[%s610 + $0x30] sm:$0xf]
    %v624 = vld [vmem:[%s610 + $0x34] sm:$0xf]
    %v625 = vld [vmem:[%s610 + $0x38] sm:$0xf]
    %v626 = vld [vmem:[%s610 + $0x3c] sm:$0xf]
    %v627 = vlaneseq
    %v628 = vshrl.u32 %v627, 7
    %v629 = vsub.s32 5, %v628
    %v630 = vrot.slane %v29, %v629
    %v647 = vunpack.c.l.b16 %v611
    %v648 = vunpack.c.l.b16 %v612
    %v649 = vunpack.c.l.b16 %v613
    %v650 = vunpack.c.l.b16 %v614
    %v651 = vunpack.c.l.b16 %v615
    %v652 = vunpack.c.l.b16 %v616
    %v653 = vunpack.c.l.b16 %v617
    %v654 = vunpack.c.l.b16 %v618
    %v655 = vunpack.c.l.b16 %v619
    %v656 = vunpack.c.l.b16 %v620
    %v657 = vunpack.c.l.b16 %v621
    %v658 = vunpack.c.l.b16 %v622
    %v659 = vunpack.c.l.b16 %v623
    %v660 = vunpack.c.l.b16 %v624
    %v661 = vunpack.c.l.b16 %v625
    %v662 = vunpack.c.l.b16 %v626
    %v663 = vpack.c.b16 %v648, %v647
    %v664 = vpack.c.b16 %v650, %v649
    %v665 = vpack.c.b16 %v652, %v651
    %v666 = vpack.c.b16 %v654, %v653
    %v667 = vpack.c.b16 %v656, %v655
    %v668 = vpack.c.b16 %v658, %v657
    %v669 = vpack.c.b16 %v660, %v659
    %v670 = vpack.c.b16 %v662, %v661
    %679 = vmatprep.subr.bf16.mxu0 0
    %680 = vmatpush1.bf16.msra.mxu0 %v670
    %681 = vmatprep.subr.bf16.mxu0 0
    %682 = vmatpush1.bf16.msra.mxu0 %v669
    %683 = vmatprep.subr.bf16.mxu0 0
    %684 = vmatpush1.bf16.msra.mxu0 %v668
    %685 = vmatprep.subr.bf16.mxu0 0
    %686 = vmatpush1.bf16.msra.mxu0 %v667
    %687 = vmatprep.subr.bf16.mxu0 0
    %688 = vmatpush1.bf16.msra.mxu0 %v666
    %689 = vmatprep.subr.bf16.mxu0 0
    %690 = vmatpush1.bf16.msra.mxu0 %v665
    %691 = vmatprep.subr.bf16.mxu0 0
    %692 = vmatpush1.bf16.msra.mxu0 %v664
    %693 = vmatprep.subr.bf16.mxu0 0
    %694 = vmatpush1.bf16.msra.mxu0 %v663
    %695 = vmatprep.subr.bf16.mxu0 0
    %696 = vmatpush2.bf16.msra.mxu0 0
    %697 = vmatprep.subr.bf16.mxu0 0
    %698 = vmatpush2.bf16.msra.mxu0 0
    %699 = vmatprep.subr.bf16.mxu0 0
    %700 = vmatpush2.bf16.msra.mxu0 0
    %701 = vmatprep.subr.bf16.mxu0 0
    %702 = vmatpush2.bf16.msra.mxu0 0
    %703 = vmatprep.subr.bf16.mxu0 0
    %704 = vmatpush2.bf16.msra.mxu0 0
    %705 = vmatprep.subr.bf16.mxu0 0
    %706 = vmatpush2.bf16.msra.mxu0 0
    %707 = vmatprep.subr.bf16.mxu0 0
    %708 = vmatpush2.bf16.msra.mxu0 0
    %709 = vmatprep.subr.bf16.mxu0 0
    %710 = vmatpush2.bf16.msra.mxu0 0
    %711 = vmatprep.mubr.bf16.mxu0 0
    %712 = vmatmul.mubr.bf16.gmra.mxu0 %v609
    %v713 = vpop.f32.mrf.mxu0
    %v714 = vadd.f32 %v630, %v713
    %v715 = vpop.f32.mrf.mxu0
    %v716 = vpop.f32.mrf.mxu0
    %v717 = vadd.f32 %v630, %v716
    %v718 = vpop.f32.mrf.mxu0
    %719 = vdwg.mxu0
    %v720 = vmul.f32 %v714, 0.2
    %v721 = vmul.f32 %v717, 0.2
    %v722 = vmax.f32 %v714, %v720
    %v723 = vmax.f32 %v717, %v721
    %v724 = vpack.c.bf16 %v723, %v722
    %s725 = scalar_lea.vmem [#allocation2], 384
    %v726 = vld [vmem:[%s725] sm:$0xf]
    %v727 = vld [vmem:[%s725 + $0x4] sm:$0xf]
    %v728 = vld [vmem:[%s725 + $0x8] sm:$0xf]
    %v729 = vld [vmem:[%s725 + $0xc] sm:$0xf]
    %v730 = vld [vmem:[%s725 + $0x10] sm:$0xf]
    %v731 = vld [vmem:[%s725 + $0x14] sm:$0xf]
    %v732 = vld [vmem:[%s725 + $0x18] sm:$0xf]
    %v733 = vld [vmem:[%s725 + $0x1c] sm:$0xf]
    %v734 = vld [vmem:[%s725 + $0x20] sm:$0xf]
    %v735 = vld [vmem:[%s725 + $0x24] sm:$0xf]
    %v736 = vld [vmem:[%s725 + $0x28] sm:$0xf]
    %v737 = vld [vmem:[%s725 + $0x2c] sm:$0xf]
    %v738 = vld [vmem:[%s725 + $0x30] sm:$0xf]
    %v739 = vld [vmem:[%s725 + $0x34] sm:$0xf]
    %v740 = vld [vmem:[%s725 + $0x38] sm:$0xf]
    %v741 = vld [vmem:[%s725 + $0x3c] sm:$0xf]
    %v742 = vlaneseq
    %v743 = vshrl.u32 %v742, 7
    %v744 = vsub.s32 6, %v743
    %v745 = vrot.slane %v29, %v744
    %v762 = vunpack.c.l.b16 %v726
    %v763 = vunpack.c.l.b16 %v727
    %v764 = vunpack.c.l.b16 %v728
    %v765 = vunpack.c.l.b16 %v729
    %v766 = vunpack.c.l.b16 %v730
    %v767 = vunpack.c.l.b16 %v731
    %v768 = vunpack.c.l.b16 %v732
    %v769 = vunpack.c.l.b16 %v733
    %v770 = vunpack.c.l.b16 %v734
    %v771 = vunpack.c.l.b16 %v735
    %v772 = vunpack.c.l.b16 %v736
    %v773 = vunpack.c.l.b16 %v737
    %v774 = vunpack.c.l.b16 %v738
    %v775 = vunpack.c.l.b16 %v739
    %v776 = vunpack.c.l.b16 %v740
    %v777 = vunpack.c.l.b16 %v741
    %v778 = vpack.c.b16 %v763, %v762
    %v779 = vpack.c.b16 %v765, %v764
    %v780 = vpack.c.b16 %v767, %v766
    %v781 = vpack.c.b16 %v769, %v768
    %v782 = vpack.c.b16 %v771, %v770
    %v783 = vpack.c.b16 %v773, %v772
    %v784 = vpack.c.b16 %v775, %v774
    %v785 = vpack.c.b16 %v777, %v776
    %794 = vmatprep.subr.bf16.mxu0 0
    %795 = vmatpush1.bf16.msra.mxu0 %v785
    %796 = vmatprep.subr.bf16.mxu0 0
    %797 = vmatpush1.bf16.msra.mxu0 %v784
    %798 = vmatprep.subr.bf16.mxu0 0
    %799 = vmatpush1.bf16.msra.mxu0 %v783
    %800 = vmatprep.subr.bf16.mxu0 0
    %801 = vmatpush1.bf16.msra.mxu0 %v782
    %802 = vmatprep.subr.bf16.mxu0 0
    %803 = vmatpush1.bf16.msra.mxu0 %v781
    %804 = vmatprep.subr.bf16.mxu0 0
    %805 = vmatpush1.bf16.msra.mxu0 %v780
    %806 = vmatprep.subr.bf16.mxu0 0
    %807 = vmatpush1.bf16.msra.mxu0 %v779
    %808 = vmatprep.subr.bf16.mxu0 0
    %809 = vmatpush1.bf16.msra.mxu0 %v778
    %810 = vmatprep.subr.bf16.mxu0 0
    %811 = vmatpush2.bf16.msra.mxu0 0
    %812 = vmatprep.subr.bf16.mxu0 0
    %813 = vmatpush2.bf16.msra.mxu0 0
    %814 = vmatprep.subr.bf16.mxu0 0
    %815 = vmatpush2.bf16.msra.mxu0 0
    %816 = vmatprep.subr.bf16.mxu0 0
    %817 = vmatpush2.bf16.msra.mxu0 0
    %818 = vmatprep.subr.bf16.mxu0 0
    %819 = vmatpush2.bf16.msra.mxu0 0
    %820 = vmatprep.subr.bf16.mxu0 0
    %821 = vmatpush2.bf16.msra.mxu0 0
    %822 = vmatprep.subr.bf16.mxu0 0
    %823 = vmatpush2.bf16.msra.mxu0 0
    %824 = vmatprep.subr.bf16.mxu0 0
    %825 = vmatpush2.bf16.msra.mxu0 0
    %826 = vmatprep.mubr.bf16.mxu0 0
    %827 = vmatmul.mubr.bf16.gmra.mxu0 %v724
    %v828 = vpop.f32.mrf.mxu0
    %v829 = vadd.f32 %v745, %v828
    %v830 = vpop.f32.mrf.mxu0
    %v831 = vpop.f32.mrf.mxu0
    %v832 = vadd.f32 %v745, %v831
    %v833 = vpop.f32.mrf.mxu0
    %834 = vdwg.mxu0
    %v835 = vtanh.pop %v829
    %v836 = vtanh.pop %v832
    %v837 = vpack.c.bf16 %v836, %v835
    %s838 = scalar_lea.vmem [#allocation2], 448
    %v839 = vld [vmem:[%s838] sm:$0xf]
    %v840 = vld [vmem:[%s838 + $0x4] sm:$0xf]
    %v841 = vld [vmem:[%s838 + $0x8] sm:$0xf]
    %v842 = vld [vmem:[%s838 + $0xc] sm:$0xf]
    %v843 = vld [vmem:[%s838 + $0x10] sm:$0xf]
    %v844 = vld [vmem:[%s838 + $0x14] sm:$0xf]
    %v845 = vld [vmem:[%s838 + $0x18] sm:$0xf]
    %v846 = vld [vmem:[%s838 + $0x1c] sm:$0xf]
    %v847 = vld [vmem:[%s838 + $0x20] sm:$0xf]
    %v848 = vld [vmem:[%s838 + $0x24] sm:$0xf]
    %v849 = vld [vmem:[%s838 + $0x28] sm:$0xf]
    %v850 = vld [vmem:[%s838 + $0x2c] sm:$0xf]
    %v851 = vld [vmem:[%s838 + $0x30] sm:$0xf]
    %v852 = vld [vmem:[%s838 + $0x34] sm:$0xf]
    %v853 = vld [vmem:[%s838 + $0x38] sm:$0xf]
    %v854 = vld [vmem:[%s838 + $0x3c] sm:$0xf]
    %v855 = vlaneseq
    %v856 = vshrl.u32 %v855, 7
    %v857 = vsub.s32 7, %v856
    %v858 = vrot.slane %v29, %v857
    %v875 = vunpack.c.l.b16 %v839
    %v876 = vunpack.c.l.b16 %v840
    %v877 = vunpack.c.l.b16 %v841
    %v878 = vunpack.c.l.b16 %v842
    %v879 = vunpack.c.l.b16 %v843
    %v880 = vunpack.c.l.b16 %v844
    %v881 = vunpack.c.l.b16 %v845
    %v882 = vunpack.c.l.b16 %v846
    %v883 = vunpack.c.l.b16 %v847
    %v884 = vunpack.c.l.b16 %v848
    %v885 = vunpack.c.l.b16 %v849
    %v886 = vunpack.c.l.b16 %v850
    %v887 = vunpack.c.l.b16 %v851
    %v888 = vunpack.c.l.b16 %v852
    %v889 = vunpack.c.l.b16 %v853
    %v890 = vunpack.c.l.b16 %v854
    %v891 = vpack.c.b16 %v876, %v875
    %v892 = vpack.c.b16 %v878, %v877
    %v893 = vpack.c.b16 %v880, %v879
    %v894 = vpack.c.b16 %v882, %v881
    %v895 = vpack.c.b16 %v884, %v883
    %v896 = vpack.c.b16 %v886, %v885
    %v897 = vpack.c.b16 %v888, %v887
    %v898 = vpack.c.b16 %v890, %v889
    %907 = vmatprep.subr.bf16.mxu0 0
    %908 = vmatpush1.bf16.msra.mxu0 %v898
    %909 = vmatprep.subr.bf16.mxu0 0
    %910 = vmatpush1.bf16.msra.mxu0 %v897
    %911 = vmatprep.subr.bf16.mxu0 0
    %912 = vmatpush1.bf16.msra.mxu0 %v896
    %913 = vmatprep.subr.bf16.mxu0 0
    %914 = vmatpush1.bf16.msra.mxu0 %v895
    %915 = vmatprep.subr.bf16.mxu0 0
    %916 = vmatpush1.bf16.msra.mxu0 %v894
    %917 = vmatprep.subr.bf16.mxu0 0
    %918 = vmatpush1.bf16.msra.mxu0 %v893
    %919 = vmatprep.subr.bf16.mxu0 0
    %920 = vmatpush1.bf16.msra.mxu0 %v892
    %921 = vmatprep.subr.bf16.mxu0 0
    %922 = vmatpush1.bf16.msra.mxu0 %v891
    %923 = vmatprep.subr.bf16.mxu0 0
    %924 = vmatpush2.bf16.msra.mxu0 0
    %925 = vmatprep.subr.bf16.mxu0 0
    %926 = vmatpush2.bf16.msra.mxu0 0
    %927 = vmatprep.subr.bf16.mxu0 0
    %928 = vmatpush2.bf16.msra.mxu0 0
    %929 = vmatprep.subr.bf16.mxu0 0
    %930 = vmatpush2.bf16.msra.mxu0 0
    %931 = vmatprep.subr.bf16.mxu0 0
    %932 = vmatpush2.bf16.msra.mxu0 0
    %933 = vmatprep.subr.bf16.mxu0 0
    %934 = vmatpush2.bf16.msra.mxu0 0
    %935 = vmatprep.subr.bf16.mxu0 0
    %936 = vmatpush2.bf16.msra.mxu0 0
    %937 = vmatprep.subr.bf16.mxu0 0
    %938 = vmatpush2.bf16.msra.mxu0 0
    %939 = vmatprep.mubr.bf16.mxu0 0
    %940 = vmatmul.mubr.bf16.gmra.mxu0 %v837
    %v941 = vpop.f32.mrf.mxu0
    %v942 = vadd.f32 %v858, %v941
    %v943 = vpop.f32.mrf.mxu0
    %v944 = vpop.f32.mrf.mxu0
    %v945 = vadd.f32 %v858, %v944
    %v946 = vpop.f32.mrf.mxu0
    %947 = vdwg.mxu0
    %vm948 = vcmask 31744
    %949 = vst.msk [vmem:[%s3] sm:$0xff] %vm948, %v942
    %950 = vst.msk [vmem:[%s3 + $0x8] sm:$0xff] %vm948, %v945
    // Predicated region
    $region18: #{bob_forward.1} parent=1 // pred_check
      _
    $region19: #{bob_forward.1} parent=1 // pred_check_branch
      %952 = sbr.rel (0) target = $region21
    $region20: #{bob_forward.1} parent=1 // pred_region
      _
    $region21: #{bob_forward.1} parent=1 // pred_fallthru
      _
    // Predicated region
    $region22: #{bob_forward.1} parent=1 // pred_check
      _
    $region23: #{bob_forward.1} parent=1 // pred_check_branch
      %954 = sbr.rel (0) target = $region25
    $region24: #{bob_forward.1} parent=1 // pred_region
      _
    $region25: #{bob_forward.1} parent=1 // pred_fallthru
      _
    %955 = vsyncpa [#allocation3], 1

</llo_original>
